<compile_context>
chip_gen: v7x
topology: tpu7x:2x2x1
jax: 0.10.0
libtpu: 0.0.40
codegen_flags: <defaults>
</compile_context>

<pallas_src>
import jax
import jax.numpy as jnp
from jax.experimental import pallas as pl
from jax.experimental.pallas import tpu as pltpu

# ---- packed parameter slab layout ------------------------------------------
LANES = 128
# bf16 weight slab rows (sublane-tile aligned to 16 for bf16)
R_W1 = 0      # fc1 weight (12 -> 50): rows 0:12,   cols 0:50 valid
R_W2 = 16     # fc2 weight (50 -> 50): rows 16:66,  cols 0:50 valid (slice 128 rows)
R_W4 = 144    # fc4 weight (50 -> 3):  rows 144:194, cols 0:3 valid (slice 128 rows)
RW_TOTAL = 272            # multiple of 16 (bf16 sublane tiling)
# f32 bias slab rows
R_B1, R_B2, R_B4 = 0, 1, 2
RB_TOTAL = 8              # multiple of 8 (f32 sublane tiling)
NEG_BIG = -1e30           # kills padded softmax lanes (exp underflows to 0)


def _mlp_kernel(x_ref, w_ref, b_ref, o_ref):
    x = x_ref[...]                                   # [TB, 12] f32

    b1 = b_ref[R_B1:R_B1 + 1, :]                     # [1, 128] f32
    b2 = b_ref[R_B2:R_B2 + 1, :]
    b4 = b_ref[R_B4:R_B4 + 1, :]                     # lanes 3:128 = NEG_BIG

    # fc1 + relu. bf16 MXU inputs, f32 accumulate; padding lanes 50:128 stay 0.
    h1 = jnp.dot(x.astype(jnp.bfloat16), w_ref[R_W1:R_W1 + 12, :],
                 preferred_element_type=jnp.float32) + b1
    h1 = jnp.maximum(h1, 0.0)                        # [TB, 128] f32

    # fc2 + relu (padding lanes stay exactly 0).
    h2 = jnp.dot(h1.astype(jnp.bfloat16), w_ref[R_W2:R_W2 + 128, :],
                 preferred_element_type=jnp.float32) + b2
    h2 = jnp.maximum(h2, 0.0)                        # [TB, 128] f32

    # fc4; lanes 3:128 get bias NEG_BIG so the softmax zeroes them out.
    logits = jnp.dot(h2.astype(jnp.bfloat16), w_ref[R_W4:R_W4 + 128, :],
                     preferred_element_type=jnp.float32) + b4   # [TB, 128]

    # numerically stable softmax over 128 lanes (only lanes 0:3 survive).
    m = jnp.max(logits, axis=-1, keepdims=True)
    e = jnp.exp(logits - m)
    denom = jnp.sum(e, axis=-1, keepdims=True)
    o_ref[...] = (e / denom).astype(o_ref.dtype)     # exact divide -> rows sum to 1


def _round_up(n, m):
    return ((n + m - 1) // m) * m


def pack_weights(params):
    """Pack (w1, w2, w4) into one [272, 128] bf16 lane-padded slab."""
    w1, _b1, w2, _b2, w4, _b4 = params
    slab = jnp.zeros((RW_TOTAL, LANES), jnp.float32)
    slab = slab.at[R_W1:R_W1 + 12, 0:50].set(w1.astype(jnp.float32))
    slab = slab.at[R_W2:R_W2 + 50, 0:50].set(w2.astype(jnp.float32))
    slab = slab.at[R_W4:R_W4 + 50, 0:3].set(w4.astype(jnp.float32))
    return slab.astype(jnp.bfloat16)


def pack_biases(params):
    """Pack (b1, b2, b4) into one [8, 128] f32 slab; fc4 padding lanes = -1e30."""
    _w1, b1, _w2, b2, _w4, b4 = params
    slab = jnp.zeros((RB_TOTAL, LANES), jnp.float32)
    slab = slab.at[R_B1, 0:50].set(b1.reshape(-1).astype(jnp.float32))
    slab = slab.at[R_B2, 0:50].set(b2.reshape(-1).astype(jnp.float32))
    slab = slab.at[R_B4, :].set(jnp.full((LANES,), NEG_BIG, jnp.float32))
    slab = slab.at[R_B4, 0:3].set(b4.reshape(-1).astype(jnp.float32))
    return slab


def mlp_forward(x, w_slab, b_slab, *, block_b=2048):
    """x: [B, 12] f32 -> [B, 3] softmax probs (f32)."""
    B, F = x.shape
    b8 = _round_up(B, 8)
    # Aim for ~8 grid steps (amortize per-step overhead, feed both v7x TCs),
    # capped at block_b so VMEM temporaries stay small (each [TB,128] f32 is
    # TB*512 B; at TB=2048 the whole footprint is a few MiB).
    tb = min(block_b, max(8, _round_up(pl.cdiv(b8, 8), 8)))
    b_pad = _round_up(b8, tb)
    # TODO(synk): for very large ragged B, handle the tail with a smaller last
    # block instead of this full jnp.pad copy.
    if b_pad != B:
        x = jnp.pad(x, ((0, b_pad - B), (0, 0)))
    grid = (b_pad // tb,)

    out = pl.pallas_call(
        _mlp_kernel,
        out_shape=jax.ShapeDtypeStruct((b_pad, LANES), jnp.float32),
        grid=grid,
        in_specs=[
            pl.BlockSpec((tb, F), lambda i: (i, 0)),              # stream x blocks
            pl.BlockSpec((RW_TOTAL, LANES), lambda i: (0, 0)),    # weights resident
            pl.BlockSpec((RB_TOTAL, LANES), lambda i: (0, 0)),    # biases resident
        ],
        out_specs=pl.BlockSpec((tb, LANES), lambda i: (i, 0)),    # lane-dense store
        compiler_params=pltpu.CompilerParams(
            dimension_semantics=("parallel",),                    # v7x: 2 TCs
            vmem_limit_bytes=32 * 1024 * 1024),
    )(x, w_slab, b_slab)
    return out[:B, 0:3]


def init_params(key):
    """Deterministic init mimicking nn.Linear default (U[-1/sqrt(fan_in), +])."""
    def linear(k, fan_in, fan_out):
        kw, kb = jax.random.split(k)
        bound = 1.0 / jnp.sqrt(float(fan_in))
        w = jax.random.uniform(kw, (fan_in, fan_out), jnp.float32, -bound, bound)
        b = jax.random.uniform(kb, (1, fan_out), jnp.float32, -bound, bound)
        return w, b

    k1, k2, k3, k4 = jax.random.split(key, 4)
    w1, b1 = linear(k1, 12, 50)
    w2, b2 = linear(k2, 50, 50)
    _w3, _b3 = linear(k3, 50, 50)   # fc3 exists in __init__ but is unused in forward
    w4, b4 = linear(k4, 50, 3)
    return (w1, b1, w2, b2, w4, b4)


def reference_forward(x, params):
    w1, b1, w2, b2, w4, b4 = params
    h = jnp.maximum(x @ w1 + b1, 0.0)
    h = jnp.maximum(h @ w2 + b2, 0.0)
    logits = h @ w4 + b4
    return jax.nn.softmax(logits, axis=-1)


if __name__ == "__main__":
    key = jax.random.PRNGKey(0)
    kx, kp = jax.random.split(key)

    batch = 20                       # not a multiple of 8 -> exercises padding path
    x = jax.random.normal(kx, (batch, 12), dtype=jnp.float32)
    params = init_params(kp)
    w_slab = pack_weights(params)
    b_slab = pack_biases(params)

    out = mlp_forward(x, w_slab, b_slab)
    out = jax.block_until_ready(out)

    ref = reference_forward(x, params)
    assert out.shape == (batch, 3)
    # exact divide -> rows sum to 1 at f32 precision
    assert jnp.allclose(jnp.sum(out, axis=-1), 1.0, atol=1e-5)
    assert bool(jnp.all(out >= 0.0))
    # bf16 MXU inputs leave ~1e-3-level differences vs the pure-f32 reference
    assert jnp.allclose(out, ref, atol=1e-2, rtol=0.0)

    print("KERNEL_OK")
</pallas_src>

<mosaic_0001>
module attributes {stable_mosaic.version = 11 : i64} {
  func.func @_mlp_kernel(%arg0: i32, %arg1: memref<8x12xf32, #tpu.memory_space<vmem>>, %arg2: memref<272x128xbf16, #tpu.memory_space<vmem>>, %arg3: memref<8x128xf32, #tpu.memory_space<vmem>>, %arg4: memref<8x128xf32, #tpu.memory_space<vmem>>) attributes {dimension_semantics = [#tpu.dimension_semantics<parallel>], iteration_bounds = array<i64: 3>, scalar_prefetch = 0 : i64, scratch_operands = 0 : i64, tpu.core_type = #tpu.core_type<tc>, window_params = [{transform_indices = @transform_0, window_bounds = array<i64: 8, 12>}, {pipeline_mode = #tpu.pipeline_mode<synchronous>, transform_indices = @transform_1, window_bounds = array<i64: 272, 128>}, {pipeline_mode = #tpu.pipeline_mode<synchronous>, transform_indices = @transform_2, window_bounds = array<i64: 8, 128>}, {transform_indices = @transform_3, window_bounds = array<i64: 8, 128>}]} {
    %c0 = arith.constant 0 : index
    %c0_0 = arith.constant 0 : index
    %0 = vector.load %arg1[%c0, %c0_0] : memref<8x12xf32, #tpu.memory_space<vmem>>, vector<8x12xf32>
    %c0_1 = arith.constant 0 : index
    %c0_2 = arith.constant 0 : index
    %1 = vector.load %arg3[%c0_1, %c0_2] : memref<8x128xf32, #tpu.memory_space<vmem>>, vector<1x128xf32>
    %c1 = arith.constant 1 : index
    %c0_3 = arith.constant 0 : index
    %2 = vector.load %arg3[%c1, %c0_3] : memref<8x128xf32, #tpu.memory_space<vmem>>, vector<1x128xf32>
    %c2 = arith.constant 2 : index
    %c0_4 = arith.constant 0 : index
    %3 = vector.load %arg3[%c2, %c0_4] : memref<8x128xf32, #tpu.memory_space<vmem>>, vector<1x128xf32>
    %4 = arith.truncf %0 : vector<8x12xf32> to vector<8x12xbf16>
    %c0_5 = arith.constant 0 : index
    %c0_6 = arith.constant 0 : index
    %5 = vector.load %arg2[%c0_5, %c0_6] : memref<272x128xbf16, #tpu.memory_space<vmem>>, vector<12x128xbf16>
    %cst = arith.constant dense<0.000000e+00> : vector<8x128xf32>
    %6 = tpu.matmul %4, %5, %cst {dimension_numbers = #tpu.dot_dimension_numbers<[1], [0], [0], [1], [0, 0, 1, 1], [], []>} : vector<8x12xbf16>, vector<12x128xbf16>, vector<8x128xf32> -> vector<8x128xf32>
    %7 = vector.broadcast %1 : vector<1x128xf32> to vector<8x128xf32>
    %8 = arith.addf %6, %7 : vector<8x128xf32>
    %cst_7 = arith.constant 0.000000e+00 : f32
    %9 = vector.broadcast %cst_7 : f32 to vector<8x128xf32>
    %10 = arith.maximumf %8, %9 : vector<8x128xf32>
    %11 = arith.truncf %10 : vector<8x128xf32> to vector<8x128xbf16>
    %c16 = arith.constant 16 : index
    %c0_8 = arith.constant 0 : index
    %12 = vector.load %arg2[%c16, %c0_8] : memref<272x128xbf16, #tpu.memory_space<vmem>>, vector<128x128xbf16>
    %cst_9 = arith.constant dense<0.000000e+00> : vector<8x128xf32>
    %13 = tpu.matmul %11, %12, %cst_9 {dimension_numbers = #tpu.dot_dimension_numbers<[1], [0], [0], [1], [0, 0, 1, 1], [], []>} : vector<8x128xbf16>, vector<128x128xbf16>, vector<8x128xf32> -> vector<8x128xf32>
    %14 = vector.broadcast %2 : vector<1x128xf32> to vector<8x128xf32>
    %15 = arith.addf %13, %14 : vector<8x128xf32>
    %cst_10 = arith.constant 0.000000e+00 : f32
    %16 = vector.broadcast %cst_10 : f32 to vector<8x128xf32>
    %17 = arith.maximumf %15, %16 : vector<8x128xf32>
    %18 = arith.truncf %17 : vector<8x128xf32> to vector<8x128xbf16>
    %c144 = arith.constant 144 : index
    %c0_11 = arith.constant 0 : index
    %19 = vector.load %arg2[%c144, %c0_11] : memref<272x128xbf16, #tpu.memory_space<vmem>>, vector<128x128xbf16>
    %cst_12 = arith.constant dense<0.000000e+00> : vector<8x128xf32>
    %20 = tpu.matmul %18, %19, %cst_12 {dimension_numbers = #tpu.dot_dimension_numbers<[1], [0], [0], [1], [0, 0, 1, 1], [], []>} : vector<8x128xbf16>, vector<128x128xbf16>, vector<8x128xf32> -> vector<8x128xf32>
    %21 = vector.broadcast %3 : vector<1x128xf32> to vector<8x128xf32>
    %22 = arith.addf %20, %21 : vector<8x128xf32>
    %cst_13 = arith.constant dense<0xFF800000> : vector<8xf32>
    %23 = vector.multi_reduction <maximumf>, %22, %cst_13 [1] : vector<8x128xf32> to vector<8xf32>
    %24 = vector.shape_cast %23 : vector<8xf32> to vector<8x1xf32>
    %25 = vector.broadcast %24 : vector<8x1xf32> to vector<8x128xf32>
    %26 = arith.subf %22, %25 : vector<8x128xf32>
    %27 = math.exp %26 : vector<8x128xf32>
    %cst_14 = arith.constant dense<0.000000e+00> : vector<8xf32>
    %28 = vector.multi_reduction <add>, %27, %cst_14 [1] : vector<8x128xf32> to vector<8xf32>
    %29 = vector.shape_cast %28 : vector<8xf32> to vector<8x1xf32>
    %30 = vector.broadcast %29 : vector<8x1xf32> to vector<8x128xf32>
    %31 = arith.divf %27, %30 : vector<8x128xf32>
    %c0_15 = arith.constant 0 : index
    %c0_16 = arith.constant 0 : index
    %32 = vector.load %arg4[%c0_15, %c0_16] : memref<8x128xf32, #tpu.memory_space<vmem>>, vector<8x128xf32>
    tpu.vector_store %arg4[%c0_15, %c0_16], %31 {strides = array<i32>} : memref<8x128xf32, #tpu.memory_space<vmem>>, vector<8x128xf32>,
    return
  }
  func.func @transform_0(%arg0: i32) -> (i32, i32) {
    %c0_i32 = arith.constant 0 : i32
    %c0_i32_0 = arith.constant 0 : i32
    return %arg0, %c0_i32 : i32, i32
  }
  func.func @transform_1(%arg0: i32) -> (i32, i32) {
    %c0_i32 = arith.constant 0 : i32
    %c0_i32_0 = arith.constant 0 : i32
    %c0_i32_1 = arith.constant 0 : i32
    return %c0_i32, %c0_i32_0 : i32, i32
  }
  func.func @transform_2(%arg0: i32) -> (i32, i32) {
    %c0_i32 = arith.constant 0 : i32
    %c0_i32_0 = arith.constant 0 : i32
    %c0_i32_1 = arith.constant 0 : i32
    return %c0_i32, %c0_i32_0 : i32, i32
  }
  func.func @transform_3(%arg0: i32) -> (i32, i32) {
    %c0_i32 = arith.constant 0 : i32
    %c0_i32_0 = arith.constant 0 : i32
    return %arg0, %c0_i32 : i32, i32
  }
}

</mosaic_0001>

<llo_original>
// kernel: tpu_custom_call.1
$region0: #{tpu_custom_call.1}
  #allocation0 [shape = 'u32[]', space=smem, size = 0x4, offset = 0x4, fixed_abs, tag = 'smem constant byte address 0x4 - core index']
  #allocation1 [shape = 'u32[144,128]{1,0:T(1,128)}', space=vmem, size = 0x12000, scoped, tag = 'internal scratch']
  %s0 = inlined_call_operand.vmem [shape: f32[24,12], index: 0, kind: input, shape index: {}]
  %s1 = inlined_call_operand.hbm [shape: bf16[272,128], index: 1, kind: input, shape index: {}]
  %s2 = inlined_call_operand.vmem [shape: f32[8,128], index: 2, kind: input, shape index: {}]
  %s3 = inlined_call_operand.hbm [shape: f32[24,128], index: 3, kind: output, shape index: {}]
  %s4 = sld [smem:[#allocation0]]
  $region49: #{tpu_custom_call.1} parent=0
    _
  %s6 = ssub.s32 1, %s4
  %s7 = scalar_select 0, %s6, %s4
  $region1: #{tpu_custom_call.1} parent=0
    #allocation2 [shape = 'u8[69632]{0}', space=vmem, size = 0x11000, scoped, tag = 'input window, operand 1, single buffered']
    #allocation3 [shape = 's32[2]{0}', space=sflag, size = 0x8, scoped, tag = 'scoped memory for tpu_custom_call.1']
    #allocation4 [shape = 's32[2]{0}', space=sflag, size = 0x8, scoped, tag = 'scoped memory for tpu_custom_call.1']
    #allocation5 [shape = 'u8[8192]{0}', space=vmem, size = 0x2000, scoped, tag = 'output window, operand 0']
    %8 = vsyncpa [#allocation3], 0
    %9 = vsyncpa [#allocation4], 0
    %s10 = scalar_lea.sflag [#allocation4], 1
    %11 = vsyncpa %s10, 0
    loop: start=0, step=1, limit=5
    $region2: #{tpu_custom_call.1} parent=1 // loop_pre_header
      _
    $region3: #{tpu_custom_call.1} parent=1 // loop_header
      %s13 = sphi 0, %s17
      %p14 = scmp.ge.s32.totalorder %s13, 5
      %s23 = sphi 0, %s25
      %s26 = sphi 0, %s23
      %s27 = sphi 0, %s26
      %s43 = sphi 0, %s27
      %s47 = sphi 0, %s47
      %s49 = sphi 0, %s47
      %s50 = sphi 0, %s49
      %s64 = sphi 0, %s50
      %s68 = sphi 0, %s68
      %s70 = sphi 0, %s68
      %s71 = sphi 0, %s70
      %s85 = sphi 0, %s71
      %s91 = sphi 0, %s93
      %s94 = sphi 0, %s91
      %s95 = sphi 0, %s94
      %s111 = sphi 0, %s95
    $region4: #{tpu_custom_call.1} parent=1 // loop_header_branch
      %16 = sbr.rel (%p14) target = $region8
    $region5: #{tpu_custom_call.1} parent=1 // loop_body
      %s18 = ssub.s32 %s13, 1
      %s19 = ssub.s32 %s13, 2
      %s20 = sadd.s32 %s13, 1
      %s21 = ssub.s32 %s13, %s20
      %p22 = scmp.eq.s32.totalorder %s21, 0
      %s24 = sadd.s32 %s23, 1
      %s25 = scalar_select %p22, %s23, %s24
      %p28 = pneg %p22
      %p29 = scmp.eq.s32.totalorder %s13, 2
      %p30 = por %p28, %p29
      %p31 = scmp.ne.s32.totalorder %s23, %s26
      %p32 = scmp.eq.s32.totalorder %s13, 0
      %p33 = por %p31, %p32
      %p34 = scmp.ne.s32.totalorder %s23, %s26
      %p35 = scmp.eq.s32.totalorder %s18, 2
      %p36 = por %p34, %p35
      %p37 = scmp.ne.s32.totalorder %s26, %s27
      %p38 = scmp.eq.s32.totalorder %s18, 0
      %p39 = por %p37, %p38
      %p40 = scmp.ne.s32.totalorder %s26, %s27
      %p41 = scmp.eq.s32.totalorder %s19, 2
      %p42 = por %p40, %p41
      %p44 = scmp.ne.s32.totalorder %s27, %s43
      %p45 = scmp.eq.s32.totalorder %s19, 0
      %p46 = por %p44, %p45
      %s48 = sadd.s32 %s47, 1
      %p51 = scmp.eq.s32.totalorder %s13, 2
      %p52 = scmp.ne.s32.totalorder %s47, %s49
      %p53 = scmp.eq.s32.totalorder %s13, 0
      %p54 = por %p52, %p53
      %p55 = scmp.ne.s32.totalorder %s47, %s49
      %p56 = scmp.eq.s32.totalorder %s18, 2
      %p57 = por %p55, %p56
      %p58 = scmp.ne.s32.totalorder %s49, %s50
      %p59 = scmp.eq.s32.totalorder %s18, 0
      %p60 = por %p58, %p59
      %p61 = scmp.ne.s32.totalorder %s49, %s50
      %p62 = scmp.eq.s32.totalorder %s19, 2
      %p63 = por %p61, %p62
      %p65 = scmp.ne.s32.totalorder %s50, %s64
      %p66 = scmp.eq.s32.totalorder %s19, 0
      %p67 = por %p65, %p66
      %s69 = sadd.s32 %s68, 1
      %p72 = scmp.eq.s32.totalorder %s13, 2
      %p73 = scmp.ne.s32.totalorder %s68, %s70
      %p74 = scmp.eq.s32.totalorder %s13, 0
      %p75 = por %p73, %p74
      %p76 = scmp.ne.s32.totalorder %s68, %s70
      %p77 = scmp.eq.s32.totalorder %s18, 2
      %p78 = por %p76, %p77
      %p79 = scmp.ne.s32.totalorder %s70, %s71
      %p80 = scmp.eq.s32.totalorder %s18, 0
      %p81 = por %p79, %p80
      %p82 = scmp.ne.s32.totalorder %s70, %s71
      %p83 = scmp.eq.s32.totalorder %s19, 2
      %p84 = por %p82, %p83
      %p86 = scmp.ne.s32.totalorder %s71, %s85
      %p87 = scmp.eq.s32.totalorder %s19, 0
      %p88 = por %p86, %p87
      %s89 = ssub.s32 %s13, %s20
      %p90 = scmp.eq.s32.totalorder %s89, 0
      %s92 = sadd.s32 %s91, 1
      %s93 = scalar_select %p90, %s91, %s92
      %p96 = pneg %p90
      %p97 = scmp.eq.s32.totalorder %s13, 2
      %p98 = por %p96, %p97
      %p99 = scmp.ne.s32.totalorder %s91, %s94
      %p100 = scmp.eq.s32.totalorder %s13, 0
      %p101 = por %p99, %p100
      %p102 = scmp.ne.s32.totalorder %s91, %s94
      %p103 = scmp.eq.s32.totalorder %s18, 2
      %p104 = por %p102, %p103
      %p105 = scmp.ne.s32.totalorder %s94, %s95
      %p106 = scmp.eq.s32.totalorder %s18, 0
      %p107 = por %p105, %p106
      %p108 = scmp.ne.s32.totalorder %s94, %s95
      %p109 = scmp.eq.s32.totalorder %s19, 2
      %p110 = por %p108, %p109
      %p112 = scmp.ne.s32.totalorder %s95, %s111
      %p113 = scmp.eq.s32.totalorder %s19, 0
      %p114 = por %p112, %p113
      %p115 = scmp.le.s32.totalorder 1, %s13
      %p116 = scmp.lt.s32.totalorder %s13, 4
      %p117 = pnand %p115, %p116
      %p118 = pneg %p117
      // Predicated region
      $region9: #{tpu_custom_call.1} parent=5 // pred_check
        _
      $region10: #{tpu_custom_call.1} parent=5 // pred_check_branch
        %120 = sbr.rel (%p117) target = $region12
      $region11: #{tpu_custom_call.1} parent=5 // pred_region
        %s121 = ssub.s32 %s13, 1
        // Predicated region
        $region13: #{tpu_custom_call.1} parent=11 // pred_check
          %p122 = pneg %p60
        $region14: #{tpu_custom_call.1} parent=11 // pred_check_branch
          %124 = sbr.rel (%p122) target = $region16
        $region15: #{tpu_custom_call.1} parent=11 // pred_region
          %s126 = ssub.s32 2176, 2176
          %127 = vsyncadd [#allocation3], %s126
          %s128 = sshll.u32 [#allocation2], 4
          %s129 = int_to_ptr.vmem [resolvable:$true] %s128
          %134 = dma.hbm_to_vmem [thread:$0]  %s1, 2176, %s129, [#allocation3], 64, 64, 4
        $region16: #{tpu_custom_call.1} parent=11 // pred_fallthru
          _
        // Predicated region
        $region17: #{tpu_custom_call.1} parent=11 // pred_check
          %p135 = pneg %p81
        $region18: #{tpu_custom_call.1} parent=11 // pred_check_branch
          %137 = sbr.rel (%p135) target = $region20
        $region19: #{tpu_custom_call.1} parent=11 // pred_region
          _
        $region20: #{tpu_custom_call.1} parent=11 // pred_fallthru
          _
      $region12: #{tpu_custom_call.1} parent=5 // pred_fallthru
        _
      %p138 = scmp.lt.s32.totalorder %s13, 3
      // Predicated region
      $region21: #{tpu_custom_call.1} parent=5 // pred_check
        %p139 = pneg %p138
      $region22: #{tpu_custom_call.1} parent=5 // pred_check_branch
        %141 = sbr.rel (%p139) target = $region24
      $region23: #{tpu_custom_call.1} parent=5 // pred_region
        // Predicated region
        $region25: #{tpu_custom_call.1} parent=23 // pred_check
          %p142 = pneg %p33
        $region26: #{tpu_custom_call.1} parent=23 // pred_check_branch
          %144 = sbr.rel (%p142) target = $region28
        $region27: #{tpu_custom_call.1} parent=23 // pred_region
          %p145 = scmp.lt.s32.totalorder %s13, 2
          %s146 = scalar_select %p145, %s13, 2
          %s147 = smul.addr %s146, 8
          %s148 = scalar_lea.vmem %s0, %s147
        $region28: #{tpu_custom_call.1} parent=23 // pred_fallthru
          _
      $region24: #{tpu_custom_call.1} parent=5 // pred_fallthru
        _
      %p149 = scmp.le.s32.totalorder 1, %s13
      %p150 = scmp.lt.s32.totalorder %s13, 4
      %p151 = pnand %p149, %p150
      %p152 = pneg %p151
      // Predicated region
      $region29: #{tpu_custom_call.1} parent=5 // pred_check
        _
      $region30: #{tpu_custom_call.1} parent=5 // pred_check_branch
        %154 = sbr.rel (%p151) target = $region32
      $region31: #{tpu_custom_call.1} parent=5 // pred_region
        %s155 = ssub.s32 %s13, 1
        // Predicated region
        $region33: #{tpu_custom_call.1} parent=31 // pred_check
          %p156 = pneg %p60
        $region34: #{tpu_custom_call.1} parent=31 // pred_check_branch
          %158 = sbr.rel (%p156) target = $region36
        $region35: #{tpu_custom_call.1} parent=31 // pred_region
          %159 = dma.done [#allocation3], 2176
        $region36: #{tpu_custom_call.1} parent=31 // pred_fallthru
          _
        %p160 = scmp.lt.s32.totalorder %s18, 2
        %s161 = scalar_select %p160, %s18, 2
        %s162 = smul.addr %s161, 8
        %s163 = scalar_lea.vmem %s0, %s162
        %p164 = pneg %p39
        %p165 = pneg %p36
        %p166 = pneg %p60
        %p167 = pneg %p57
        %p168 = pneg %p81
        %p169 = pneg %p78
        %p170 = pneg %p107
        %p171 = pneg %p104
        %s172 = sand.u32 %s94, 1
        %s173 = scalar_lea.sflag [#allocation4], %s172
        %s174 = sand.u32 %s94, 1
        %s175 = smul.addr %s174, 8
        %s176 = scalar_lea.vmem [#allocation5], %s175
        %p177 = scmp.lt.s32.totalorder %s18, 2
        %s178 = scalar_select %p177, %s18, 2
        %s179 = smul.addr %s178, 8
        %s180 = scalar_lea.vmem %s0, %s179
        %v182 = vld [vmem:[%s180] sm:$0xff]
        %v183 = vld [vmem:[%s2] sm:$0x1]
        %v184 = vld [vmem:[%s2 + $0x1] sm:$0x1]
        %v185 = vld [vmem:[%s2 + $0x2] sm:$0x1]
        %v186 = vpack.c.bf16 %v182, %v182
        %v187 = vld [vmem:[#allocation2] sm:$0xf]
        %v188 = vld [vmem:[#allocation2 + $0x4] sm:$0x3]
        %v189 = vlaneseq
        %v190 = vshrl.u32 %v189, 7
        %v191 = vsub.s32 0, %v190
        %v192 = vrot.slane %v183, %v191
        %v195 = vunpack.c.l.b16 %v187
        %v196 = vunpack.c.l.b16 %v188
        %v197 = vpack.c.b16 %v196, %v195
        %vm198 = vcmask 97280
        %v200 = vsel %vm198, %v186, 0
        %vm202 = vcmask 1045504
        %v204 = vsel %vm202, %v197, 0
        %206 = vmatprep.subr.bf16.mxu0 0
        %207 = vmatpush1.bf16.msra.mxu0 %v204
        %208 = vmatprep.subr.bf16.mxu0 0
        %209 = vmatpush1.bf16.msra.mxu0 0
        %210 = vmatprep.subr.bf16.mxu0 0
        %211 = vmatpush1.bf16.msra.mxu0 0
        %212 = vmatprep.subr.bf16.mxu0 0
        %213 = vmatpush1.bf16.msra.mxu0 0
        %214 = vmatprep.subr.bf16.mxu0 0
        %215 = vmatpush1.bf16.msra.mxu0 0
        %216 = vmatprep.subr.bf16.mxu0 0
        %217 = vmatpush1.bf16.msra.mxu0 0
        %218 = vmatprep.subr.bf16.mxu0 0
        %219 = vmatpush1.bf16.msra.mxu0 0
        %220 = vmatprep.subr.bf16.mxu0 0
        %221 = vmatpush1.bf16.msra.mxu0 0
        %222 = vmatprep.subr.bf16.mxu0 0
        %223 = vmatpush1.bf16.msra.mxu0 0
        %224 = vmatprep.subr.bf16.mxu0 0
        %225 = vmatpush1.bf16.msra.mxu0 0
        %226 = vmatprep.subr.bf16.mxu0 0
        %227 = vmatpush1.bf16.msra.mxu0 0
        %228 = vmatprep.subr.bf16.mxu0 0
        %229 = vmatpush1.bf16.msra.mxu0 0
        %230 = vmatprep.subr.bf16.mxu0 0
        %231 = vmatpush1.bf16.msra.mxu0 0
        %232 = vmatprep.subr.bf16.mxu0 0
        %233 = vmatpush1.bf16.msra.mxu0 0
        %234 = vmatprep.subr.bf16.mxu0 0
        %235 = vmatpush1.bf16.msra.mxu0 0
        %236 = vmatprep.subr.bf16.mxu0 0
        %237 = vmatpush1.bf16.msra.mxu0 0
        %238 = vmatprep.mubr.bf16.mxu0 0
        %239 = vmatmul.mubr.bf16.gmra.mrb[0].mxu0 %v200
        %v240 = vpop.f32.mrb[0].mxu0
        %v241 = vadd.f32 %v192, %v240
        %v242 = vpop.f32.mrb[0].mxu0
        %v243 = vpop.f32.mrb[0].mxu0
        %v244 = vpop.f32.mrb[0].mxu0
        %245 = vdwg.mxu0
        %v246 = vmax.f32 %v241, 0.0
        %v247 = vpack.c.bf16 %v246, %v246
        %v248 = vld [vmem:[#allocation2 + $0x8] sm:$0xf]
        %v249 = vld [vmem:[#allocation2 + $0xc] sm:$0xf]
        %v250 = vld [vmem:[#allocation2 + $0x10] sm:$0xf]
        %v251 = vld [vmem:[#allocation2 + $0x14] sm:$0xf]
        %v252 = vld [vmem:[#allocation2 + $0x18] sm:$0xf]
        %v253 = vld [vmem:[#allocation2 + $0x1c] sm:$0xf]
        %v254 = vld [vmem:[#allocation2 + $0x20] sm:$0xf]
        %v255 = vld [vmem:[#allocation2 + $0x24] sm:$0xf]
        %v256 = vld [vmem:[#allocation2 + $0x28] sm:$0xf]
        %v257 = vld [vmem:[#allocation2 + $0x2c] sm:$0xf]
        %v258 = vld [vmem:[#allocation2 + $0x30] sm:$0xf]
        %v259 = vld [vmem:[#allocation2 + $0x34] sm:$0xf]
        %v260 = vld [vmem:[#allocation2 + $0x38] sm:$0xf]
        %v261 = vld [vmem:[#allocation2 + $0x3c] sm:$0xf]
        %v262 = vld [vmem:[#allocation2 + $0x40] sm:$0xf]
        %v263 = vld [vmem:[#allocation2 + $0x44] sm:$0xf]
        %v264 = vlaneseq
        %v265 = vshrl.u32 %v264, 7
        %v266 = vsub.s32 0, %v265
        %v267 = vrot.slane %v184, %v266
        %v284 = vunpack.c.l.b16 %v248
        %v285 = vunpack.c.l.b16 %v249
        %v286 = vunpack.c.l.b16 %v250
        %v287 = vunpack.c.l.b16 %v251
        %v288 = vunpack.c.l.b16 %v252
        %v289 = vunpack.c.l.b16 %v253
        %v290 = vunpack.c.l.b16 %v254
        %v291 = vunpack.c.l.b16 %v255
        %v292 = vunpack.c.l.b16 %v256
        %v293 = vunpack.c.l.b16 %v257
        %v294 = vunpack.c.l.b16 %v258
        %v295 = vunpack.c.l.b16 %v259
        %v296 = vunpack.c.l.b16 %v260
        %v297 = vunpack.c.l.b16 %v261
        %v298 = vunpack.c.l.b16 %v262
        %v299 = vunpack.c.l.b16 %v263
        %v300 = vpack.c.b16 %v285, %v284
        %v301 = vpack.c.b16 %v287, %v286
        %v302 = vpack.c.b16 %v289, %v288
        %v303 = vpack.c.b16 %v291, %v290
        %v304 = vpack.c.b16 %v293, %v292
        %v305 = vpack.c.b16 %v295, %v294
        %v306 = vpack.c.b16 %v297, %v296
        %v307 = vpack.c.b16 %v299, %v298
        %316 = vmatprep.subr.bf16.mxu0 0
        %317 = vmatpush1.bf16.msra.mxu0 %v300
        %318 = vmatprep.subr.bf16.mxu0 0
        %319 = vmatpush1.bf16.msra.mxu0 %v301
        %320 = vmatprep.subr.bf16.mxu0 0
        %321 = vmatpush1.bf16.msra.mxu0 %v302
        %322 = vmatprep.subr.bf16.mxu0 0
        %323 = vmatpush1.bf16.msra.mxu0 %v303
        %324 = vmatprep.subr.bf16.mxu0 0
        %325 = vmatpush1.bf16.msra.mxu0 %v304
        %326 = vmatprep.subr.bf16.mxu0 0
        %327 = vmatpush1.bf16.msra.mxu0 %v305
        %328 = vmatprep.subr.bf16.mxu0 0
        %329 = vmatpush1.bf16.msra.mxu0 %v306
        %330 = vmatprep.subr.bf16.mxu0 0
        %331 = vmatpush1.bf16.msra.mxu0 %v307
        %332 = vmatprep.subr.bf16.mxu0 0
        %333 = vmatpush1.bf16.msra.mxu0 0
        %334 = vmatprep.subr.bf16.mxu0 0
        %335 = vmatpush1.bf16.msra.mxu0 0
        %336 = vmatprep.subr.bf16.mxu0 0
        %337 = vmatpush1.bf16.msra.mxu0 0
        %338 = vmatprep.subr.bf16.mxu0 0
        %339 = vmatpush1.bf16.msra.mxu0 0
        %340 = vmatprep.subr.bf16.mxu0 0
        %341 = vmatpush1.bf16.msra.mxu0 0
        %342 = vmatprep.subr.bf16.mxu0 0
        %343 = vmatpush1.bf16.msra.mxu0 0
        %344 = vmatprep.subr.bf16.mxu0 0
        %345 = vmatpush1.bf16.msra.mxu0 0
        %346 = vmatprep.subr.bf16.mxu0 0
        %347 = vmatpush1.bf16.msra.mxu0 0
        %348 = vmatprep.mubr.bf16.mxu0 0
        %349 = vmatmul.mubr.bf16.gmra.mrb[0].mxu0 %v247
        %v350 = vpop.f32.mrb[0].mxu0
        %v351 = vadd.f32 %v267, %v350
        %v352 = vpop.f32.mrb[0].mxu0
        %v353 = vpop.f32.mrb[0].mxu0
        %v354 = vpop.f32.mrb[0].mxu0
        %355 = vdwg.mxu0
        %v356 = vmax.f32 %v351, 0.0
        %v357 = vpack.c.bf16 %v356, %v356
        %v358 = vld [vmem:[#allocation2 + $0x48] sm:$0xf]
        %v359 = vld [vmem:[#allocation2 + $0x4c] sm:$0xf]
        %v360 = vld [vmem:[#allocation2 + $0x50] sm:$0xf]
        %v361 = vld [vmem:[#allocation2 + $0x54] sm:$0xf]
        %v362 = vld [vmem:[#allocation2 + $0x58] sm:$0xf]
        %v363 = vld [vmem:[#allocation2 + $0x5c] sm:$0xf]
        %v364 = vld [vmem:[#allocation2 + $0x60] sm:$0xf]
        %v365 = vld [vmem:[#allocation2 + $0x64] sm:$0xf]
        %v366 = vld [vmem:[#allocation2 + $0x68] sm:$0xf]
        %v367 = vld [vmem:[#allocation2 + $0x6c] sm:$0xf]
        %v368 = vld [vmem:[#allocation2 + $0x70] sm:$0xf]
        %v369 = vld [vmem:[#allocation2 + $0x74] sm:$0xf]
        %v370 = vld [vmem:[#allocation2 + $0x78] sm:$0xf]
        %v371 = vld [vmem:[#allocation2 + $0x7c] sm:$0xf]
        %v372 = vld [vmem:[#allocation2 + $0x80] sm:$0xf]
        %v373 = vld [vmem:[#allocation2 + $0x84] sm:$0xf]
        %v374 = vlaneseq
        %v375 = vshrl.u32 %v374, 7
        %v376 = vsub.s32 0, %v375
        %v377 = vrot.slane %v185, %v376
        %v394 = vunpack.c.l.b16 %v358
        %v395 = vunpack.c.l.b16 %v359
        %v396 = vunpack.c.l.b16 %v360
        %v397 = vunpack.c.l.b16 %v361
        %v398 = vunpack.c.l.b16 %v362
        %v399 = vunpack.c.l.b16 %v363
        %v400 = vunpack.c.l.b16 %v364
        %v401 = vunpack.c.l.b16 %v365
        %v402 = vunpack.c.l.b16 %v366
        %v403 = vunpack.c.l.b16 %v367
        %v404 = vunpack.c.l.b16 %v368
        %v405 = vunpack.c.l.b16 %v369
        %v406 = vunpack.c.l.b16 %v370
        %v407 = vunpack.c.l.b16 %v371
        %v408 = vunpack.c.l.b16 %v372
        %v409 = vunpack.c.l.b16 %v373
        %v410 = vpack.c.b16 %v395, %v394
        %v411 = vpack.c.b16 %v397, %v396
        %v412 = vpack.c.b16 %v399, %v398
        %v413 = vpack.c.b16 %v401, %v400
        %v414 = vpack.c.b16 %v403, %v402
        %v415 = vpack.c.b16 %v405, %v404
        %v416 = vpack.c.b16 %v407, %v406
        %v417 = vpack.c.b16 %v409, %v408
        %426 = vmatprep.subr.bf16.mxu0 0
        %427 = vmatpush1.bf16.msra.mxu0 %v410
        %428 = vmatprep.subr.bf16.mxu0 0
        %429 = vmatpush1.bf16.msra.mxu0 %v411
        %430 = vmatprep.subr.bf16.mxu0 0
        %431 = vmatpush1.bf16.msra.mxu0 %v412
        %432 = vmatprep.subr.bf16.mxu0 0
        %433 = vmatpush1.bf16.msra.mxu0 %v413
        %434 = vmatprep.subr.bf16.mxu0 0
        %435 = vmatpush1.bf16.msra.mxu0 %v414
        %436 = vmatprep.subr.bf16.mxu0 0
        %437 = vmatpush1.bf16.msra.mxu0 %v415
        %438 = vmatprep.subr.bf16.mxu0 0
        %439 = vmatpush1.bf16.msra.mxu0 %v416
        %440 = vmatprep.subr.bf16.mxu0 0
        %441 = vmatpush1.bf16.msra.mxu0 %v417
        %442 = vmatprep.subr.bf16.mxu0 0
        %443 = vmatpush1.bf16.msra.mxu0 0
        %444 = vmatprep.subr.bf16.mxu0 0
        %445 = vmatpush1.bf16.msra.mxu0 0
        %446 = vmatprep.subr.bf16.mxu0 0
        %447 = vmatpush1.bf16.msra.mxu0 0
        %448 = vmatprep.subr.bf16.mxu0 0
        %449 = vmatpush1.bf16.msra.mxu0 0
        %450 = vmatprep.subr.bf16.mxu0 0
        %451 = vmatpush1.bf16.msra.mxu0 0
        %452 = vmatprep.subr.bf16.mxu0 0
        %453 = vmatpush1.bf16.msra.mxu0 0
        %454 = vmatprep.subr.bf16.mxu0 0
        %455 = vmatpush1.bf16.msra.mxu0 0
        %456 = vmatprep.subr.bf16.mxu0 0
        %457 = vmatpush1.bf16.msra.mxu0 0
        %458 = vmatprep.mubr.bf16.mxu0 0
        %459 = vmatmul.mubr.bf16.gmra.mrb[0].mxu0 %v357
        %v460 = vpop.f32.mrb[0].mxu0
        %v461 = vadd.f32 %v377, %v460
        %v462 = vpop.f32.mrb[0].mxu0
        %v463 = vpop.f32.mrb[0].mxu0
        %v464 = vpop.f32.mrb[0].mxu0
        %465 = vdwg.mxu0
        %466 = vmax.xlane.f32.xlu0 %v461
        %v467 = vpop.xlane.xlu0 %466
        %v468 = vsub.f32 %v461, %v467
        %v469 = vmul.f32 %v468, 1.442695
        %v470 = vpow.pop %v469
        %471 = vadd.xlane.f32.xlu0 %v470
        %v472 = vpop.xlane.xlu0 %471
        %v473 = vrcp.pop %v472
        %v474 = vmul.f32 %v470, %v473
        %475 = vst [vmem:[%s176] sm:$0xff] %v474
        %s476 = sand.u32 %s94, 1
        %s477 = scalar_lea.sflag [#allocation4], %s476
        %s478 = sand.u32 %s94, 1
        %s479 = smul.addr %s478, 8
        %s480 = scalar_lea.vmem [#allocation5], %s479
        // Predicated region
        $region37: #{tpu_custom_call.1} parent=31 // pred_check
          %p481 = pneg %p104
        $region38: #{tpu_custom_call.1} parent=31 // pred_check_branch
          %483 = sbr.rel (%p481) target = $region40
        $region39: #{tpu_custom_call.1} parent=31 // pred_region
          %s485 = ssub.s32 128, 128
          %486 = vsyncadd %s477, %s485
          %s487 = smul.addr %s18, 128
          %s488 = scalar_lea.hbm %s3, %s487
          %s490 = sshll.u32 %s480, 4
          %s491 = int_to_ptr.vmem [resolvable:$true] %s490
          %493 = dma.vmem_to_hbm [thread:$0]  %s491, 128, %s488, %s477
        $region40: #{tpu_custom_call.1} parent=31 // pred_fallthru
          _
      $region32: #{tpu_custom_call.1} parent=5 // pred_fallthru
        _
      %p494 = scmp.le.s32.totalorder 2, %s13
      // Predicated region
      $region41: #{tpu_custom_call.1} parent=5 // pred_check
        %p495 = pneg %p494
      $region42: #{tpu_custom_call.1} parent=5 // pred_check_branch
        %497 = sbr.rel (%p495) target = $region44
      $region43: #{tpu_custom_call.1} parent=5 // pred_region
        %s498 = ssub.s32 %s13, 2
        // Predicated region
        $region45: #{tpu_custom_call.1} parent=43 // pred_check
          %p499 = pneg %p110
        $region46: #{tpu_custom_call.1} parent=43 // pred_check_branch
          %501 = sbr.rel (%p499) target = $region48
        $region47: #{tpu_custom_call.1} parent=43 // pred_region
          %s502 = sand.u32 %s95, 1
          %s503 = scalar_lea.sflag [#allocation4], %s502
          %s504 = sand.u32 %s95, 1
          %s505 = smul.addr %s504, 8
          %s506 = scalar_lea.vmem [#allocation5], %s505
          %507 = dma.done %s503, 128
        $region48: #{tpu_custom_call.1} parent=43 // pred_fallthru
          _
      $region44: #{tpu_custom_call.1} parent=5 // pred_fallthru
        _
    $region6: #{tpu_custom_call.1} parent=1 // loop_footer
      %s17 = sadd.s32 1, %s13
    $region7: #{tpu_custom_call.1} parent=1 // loop_footer_branch
      %12 = sbr.rel target = $region3
    $region8: #{tpu_custom_call.1} parent=1 // loop_exit
      _
    %508 = vsyncpa [#allocation3], 1
    %s509 = scalar_lea.sflag [#allocation3], 1
    %510 = vsyncpa %s509, 1
    %511 = vsyncpa [#allocation4], 1
    %s512 = scalar_lea.sflag [#allocation4], 1
    %513 = vsyncpa %s512, 1

</llo_original>
